<compile_context>
chip_gen: v7x
topology: tpu7x:2x2x1
jax: 0.10.0
libtpu: 0.0.40
codegen_flags: <defaults>
</compile_context>

<pallas_src>
import functools

import jax
import jax.numpy as jnp
from jax import lax
from jax.experimental import pallas as pl
from jax.experimental.pallas import tpu as pltpu


def _rnn_kernel(x_ref, h0_ref, pack_ref, bout_ref, y_ref, hN_ref):
    B, T, I = x_ref.shape
    H = h0_ref.shape[1]

    # ---- Loop-invariant params, sliced once from the packed VMEM slab -------------
    whh_t = pack_ref[0:H, :]                    # (H, H)  == W_hh^T (pre-transposed)
    wih_t = pack_ref[H:H + I, :]                # (I, H)  == W_ih^T
    bias = pack_ref[H + I:H + I + 1, :]         # (1, H)  == b_ih + b_hh
    wout = pack_ref[H + I + 1:H + I + 2, :]     # (1, H)  == Linear weight row

    # ---- Hoisted input projection for every timestep (off the serial chain) -------
    x_all = x_ref[...]                                           # (B, T, I)
    if I == 1:
        # I == 1: projection is a lane-broadcast multiply (pure VPU, no MXU).
        xp = x_all * wih_t.reshape(1, 1, H) + bias.reshape(1, 1, H)      # (B, T, H)
    else:
        xp = lax.dot_general(x_all.reshape(B * T, I), wih_t,
                             (((1,), (0,)), ((), ())),
                             preferred_element_type=jnp.float32)
        xp = xp.reshape(B, T, H) + bias.reshape(1, 1, H)

    # ---- Serial recurrence: fully unrolled; only h @ W_hh^T + tanh on the chain ---
    h = h0_ref[...]                                              # (B, H)
    hs = []
    for t in range(T):                                           # static T -> unrolled
        h = jnp.tanh(xp[:, t, :]
                     + jnp.dot(h, whh_t, preferred_element_type=jnp.float32))
        hs.append(h)
    hN_ref[...] = h

    # ---- Output Linear(H -> 1) in bulk: VPU multiply + lane reduce, one store -----
    h_all = jnp.stack(hs, axis=1)                                # (B, T, H), 2 vregs
    y_ref[...] = (jnp.sum(h_all * wout.reshape(1, 1, H), axis=-1)
                  + bout_ref[0])                                 # (B, T)


@jax.jit
def _forward(x, h0, params):
    B, T, I = x.shape
    H = params["w_hh"].shape[0]

    # One packed VMEM slab for all loop-invariant vector params (single DMA).
    # Built under the same jit as the kernel call, so it fuses into one tiny XLA op.
    pack = jnp.concatenate(
        [params["w_hh"].T,                                   # (H, H)  W_hh^T
         params["w_ih"].T,                                    # (I, H)  W_ih^T
         (params["b_ih"] + params["b_hh"]).reshape(1, H),     # (1, H)
         params["w_out"].reshape(1, H)],                      # (1, H)
        axis=0).astype(jnp.float32)                           # (H+I+2, H)
    b_out = params["b_out"].reshape(1).astype(jnp.float32)

    vmem = pl.BlockSpec(memory_space=pltpu.MemorySpace.VMEM)
    smem = pl.BlockSpec(memory_space=pltpu.MemorySpace.SMEM)

    y, h_last = pl.pallas_call(
        _rnn_kernel,
        out_shape=(jax.ShapeDtypeStruct((B, T), jnp.float32),
                   jax.ShapeDtypeStruct((B, H), jnp.float32)),
        in_specs=[vmem, vmem, vmem, smem],
        out_specs=(vmem, vmem),
    )(x.astype(jnp.float32), h0, pack, b_out)

    # Unit-dim reshapes only (free under jit) -- no transposes.
    return y.reshape(B, T, 1), h_last.reshape(1, B, H)


def rnn_forward(x, h_state, params):
    """x: (B, T, I) float32 (batch_first, like PyTorch).
       h_state: (1, B, H) or None.
       Returns (y: (B, T, 1), h_state_out: (1, B, H))."""
    B, T, I = x.shape
    H = params["w_hh"].shape[0]
    if h_state is None:
        h0 = jnp.zeros((B, H), jnp.float32)
    else:
        h0 = h_state.reshape(B, H).astype(jnp.float32)
    return _forward(x, h0, params)


def _reference(x, h_state, params):
    """Pure-JAX reference (lax.scan) matching PyTorch nn.RNN + Linear."""
    B, T, I = x.shape
    H = params["w_hh"].shape[0]
    h0 = jnp.zeros((B, H)) if h_state is None else h_state.reshape(B, H)

    def step(h, x_t):
        h_new = jnp.tanh(x_t @ params["w_ih"].T + params["b_ih"]
                         + h @ params["w_hh"].T + params["b_hh"])
        y_t = h_new @ params["w_out"].T + params["b_out"]
        return h_new, y_t

    h_last, ys = lax.scan(step, h0, jnp.transpose(x, (1, 0, 2)))
    return jnp.transpose(ys, (1, 0, 2)), h_last.reshape(1, B, H)


def init_params(key, input_size=1, hidden_size=32):
    # PyTorch default init: U(-1/sqrt(H), 1/sqrt(H)) for RNN and Linear params.
    k = 1.0 / jnp.sqrt(hidden_size)
    keys = jax.random.split(key, 6)
    u = lambda kk, shape: jax.random.uniform(kk, shape, jnp.float32, -k, k)
    return {
        "w_ih": u(keys[0], (hidden_size, input_size)),
        "w_hh": u(keys[1], (hidden_size, hidden_size)),
        "b_ih": u(keys[2], (hidden_size,)),
        "b_hh": u(keys[3], (hidden_size,)),
        "w_out": u(keys[4], (1, hidden_size)),
        "b_out": u(keys[5], (1,)),
    }


if __name__ == "__main__":
    key = jax.random.PRNGKey(0)
    kp, kx = jax.random.split(key)

    INPUT_SIZE, HIDDEN, B, T = 1, 32, 2, 8
    params = init_params(kp, INPUT_SIZE, HIDDEN)
    x = jax.random.normal(kx, (B, T, INPUT_SIZE), jnp.float32)
    h_state = None   # matches the PyTorch snippet's `h_state = None`

    y, h_out = rnn_forward(x, h_state, params)
    jax.block_until_ready((y, h_out))

    y_ref, h_ref = _reference(x, h_state, params)
    assert y.shape == (B, T, 1) and h_out.shape == (1, B, HIDDEN)
    assert jnp.allclose(y, y_ref, atol=1e-5), "output mismatch vs reference"
    assert jnp.allclose(h_out, h_ref, atol=1e-5), "hidden state mismatch vs reference"

    print("KERNEL_OK")
</pallas_src>

<mosaic_0001>
module attributes {stable_mosaic.version = 11 : i64} {
  func.func @_rnn_kernel(%arg0: memref<2x8x1xf32, #tpu.memory_space<vmem>>, %arg1: memref<2x32xf32, #tpu.memory_space<vmem>>, %arg2: memref<35x32xf32, #tpu.memory_space<vmem>>, %arg3: memref<1xf32, #tpu.memory_space<smem>>, %arg4: memref<2x8xf32, #tpu.memory_space<vmem>>, %arg5: memref<2x32xf32, #tpu.memory_space<vmem>>) attributes {dimension_semantics = [], scalar_prefetch = 0 : i64, scratch_operands = 0 : i64, tpu.core_type = #tpu.core_type<tc>} {
    %c0 = arith.constant 0 : index
    %c0_0 = arith.constant 0 : index
    %0 = vector.load %arg2[%c0, %c0_0] : memref<35x32xf32, #tpu.memory_space<vmem>>, vector<32x32xf32>
    %c32 = arith.constant 32 : index
    %c0_1 = arith.constant 0 : index
    %1 = vector.load %arg2[%c32, %c0_1] : memref<35x32xf32, #tpu.memory_space<vmem>>, vector<1x32xf32>
    %c33 = arith.constant 33 : index
    %c0_2 = arith.constant 0 : index
    %2 = vector.load %arg2[%c33, %c0_2] : memref<35x32xf32, #tpu.memory_space<vmem>>, vector<1x32xf32>
    %c34 = arith.constant 34 : index
    %c0_3 = arith.constant 0 : index
    %3 = vector.load %arg2[%c34, %c0_3] : memref<35x32xf32, #tpu.memory_space<vmem>>, vector<1x32xf32>
    %c0_4 = arith.constant 0 : index
    %c0_5 = arith.constant 0 : index
    %c0_6 = arith.constant 0 : index
    %4 = vector.load %arg0[%c0_4, %c0_5, %c0_6] : memref<2x8x1xf32, #tpu.memory_space<vmem>>, vector<2x8x1xf32>
    %5 = vector.shape_cast %1 : vector<1x32xf32> to vector<1x1x32xf32>
    %6 = vector.broadcast %4 : vector<2x8x1xf32> to vector<2x8x32xf32>
    %7 = vector.broadcast %5 : vector<1x1x32xf32> to vector<2x8x32xf32>
    %8 = arith.mulf %6, %7 : vector<2x8x32xf32>
    %9 = vector.shape_cast %2 : vector<1x32xf32> to vector<1x1x32xf32>
    %10 = vector.broadcast %9 : vector<1x1x32xf32> to vector<2x8x32xf32>
    %11 = arith.addf %8, %10 : vector<2x8x32xf32>
    %c0_7 = arith.constant 0 : index
    %c0_8 = arith.constant 0 : index
    %12 = vector.load %arg1[%c0_7, %c0_8] : memref<2x32xf32, #tpu.memory_space<vmem>>, vector<2x32xf32>
    %13 = vector.extract_strided_slice %11 {offsets = [0, 0, 0], sizes = [2, 1, 32], strides = [1, 1, 1]} : vector<2x8x32xf32> to vector<2x1x32xf32>
    %14 = vector.shape_cast %13 : vector<2x1x32xf32> to vector<2x32xf32>
    %cst = arith.constant dense<0.000000e+00> : vector<2x32xf32>
    %15 = tpu.matmul %12, %0, %cst {dimension_numbers = #tpu.dot_dimension_numbers<[1], [0], [0], [1], [0, 0, 1, 1], [], []>} : vector<2x32xf32>, vector<32x32xf32>, vector<2x32xf32> -> vector<2x32xf32>
    %16 = arith.addf %14, %15 : vector<2x32xf32>
    %17 = math.tanh %16 : vector<2x32xf32>
    %18 = vector.extract_strided_slice %11 {offsets = [0, 1, 0], sizes = [2, 1, 32], strides = [1, 1, 1]} : vector<2x8x32xf32> to vector<2x1x32xf32>
    %19 = vector.shape_cast %18 : vector<2x1x32xf32> to vector<2x32xf32>
    %cst_9 = arith.constant dense<0.000000e+00> : vector<2x32xf32>
    %20 = tpu.matmul %17, %0, %cst_9 {dimension_numbers = #tpu.dot_dimension_numbers<[1], [0], [0], [1], [0, 0, 1, 1], [], []>} : vector<2x32xf32>, vector<32x32xf32>, vector<2x32xf32> -> vector<2x32xf32>
    %21 = arith.addf %19, %20 : vector<2x32xf32>
    %22 = math.tanh %21 : vector<2x32xf32>
    %23 = vector.extract_strided_slice %11 {offsets = [0, 2, 0], sizes = [2, 1, 32], strides = [1, 1, 1]} : vector<2x8x32xf32> to vector<2x1x32xf32>
    %24 = vector.shape_cast %23 : vector<2x1x32xf32> to vector<2x32xf32>
    %cst_10 = arith.constant dense<0.000000e+00> : vector<2x32xf32>
    %25 = tpu.matmul %22, %0, %cst_10 {dimension_numbers = #tpu.dot_dimension_numbers<[1], [0], [0], [1], [0, 0, 1, 1], [], []>} : vector<2x32xf32>, vector<32x32xf32>, vector<2x32xf32> -> vector<2x32xf32>
    %26 = arith.addf %24, %25 : vector<2x32xf32>
    %27 = math.tanh %26 : vector<2x32xf32>
    %28 = vector.extract_strided_slice %11 {offsets = [0, 3, 0], sizes = [2, 1, 32], strides = [1, 1, 1]} : vector<2x8x32xf32> to vector<2x1x32xf32>
    %29 = vector.shape_cast %28 : vector<2x1x32xf32> to vector<2x32xf32>
    %cst_11 = arith.constant dense<0.000000e+00> : vector<2x32xf32>
    %30 = tpu.matmul %27, %0, %cst_11 {dimension_numbers = #tpu.dot_dimension_numbers<[1], [0], [0], [1], [0, 0, 1, 1], [], []>} : vector<2x32xf32>, vector<32x32xf32>, vector<2x32xf32> -> vector<2x32xf32>
    %31 = arith.addf %29, %30 : vector<2x32xf32>
    %32 = math.tanh %31 : vector<2x32xf32>
    %33 = vector.extract_strided_slice %11 {offsets = [0, 4, 0], sizes = [2, 1, 32], strides = [1, 1, 1]} : vector<2x8x32xf32> to vector<2x1x32xf32>
    %34 = vector.shape_cast %33 : vector<2x1x32xf32> to vector<2x32xf32>
    %cst_12 = arith.constant dense<0.000000e+00> : vector<2x32xf32>
    %35 = tpu.matmul %32, %0, %cst_12 {dimension_numbers = #tpu.dot_dimension_numbers<[1], [0], [0], [1], [0, 0, 1, 1], [], []>} : vector<2x32xf32>, vector<32x32xf32>, vector<2x32xf32> -> vector<2x32xf32>
    %36 = arith.addf %34, %35 : vector<2x32xf32>
    %37 = math.tanh %36 : vector<2x32xf32>
    %38 = vector.extract_strided_slice %11 {offsets = [0, 5, 0], sizes = [2, 1, 32], strides = [1, 1, 1]} : vector<2x8x32xf32> to vector<2x1x32xf32>
    %39 = vector.shape_cast %38 : vector<2x1x32xf32> to vector<2x32xf32>
    %cst_13 = arith.constant dense<0.000000e+00> : vector<2x32xf32>
    %40 = tpu.matmul %37, %0, %cst_13 {dimension_numbers = #tpu.dot_dimension_numbers<[1], [0], [0], [1], [0, 0, 1, 1], [], []>} : vector<2x32xf32>, vector<32x32xf32>, vector<2x32xf32> -> vector<2x32xf32>
    %41 = arith.addf %39, %40 : vector<2x32xf32>
    %42 = math.tanh %41 : vector<2x32xf32>
    %43 = vector.extract_strided_slice %11 {offsets = [0, 6, 0], sizes = [2, 1, 32], strides = [1, 1, 1]} : vector<2x8x32xf32> to vector<2x1x32xf32>
    %44 = vector.shape_cast %43 : vector<2x1x32xf32> to vector<2x32xf32>
    %cst_14 = arith.constant dense<0.000000e+00> : vector<2x32xf32>
    %45 = tpu.matmul %42, %0, %cst_14 {dimension_numbers = #tpu.dot_dimension_numbers<[1], [0], [0], [1], [0, 0, 1, 1], [], []>} : vector<2x32xf32>, vector<32x32xf32>, vector<2x32xf32> -> vector<2x32xf32>
    %46 = arith.addf %44, %45 : vector<2x32xf32>
    %47 = math.tanh %46 : vector<2x32xf32>
    %48 = vector.extract_strided_slice %11 {offsets = [0, 7, 0], sizes = [2, 1, 32], strides = [1, 1, 1]} : vector<2x8x32xf32> to vector<2x1x32xf32>
    %49 = vector.shape_cast %48 : vector<2x1x32xf32> to vector<2x32xf32>
    %cst_15 = arith.constant dense<0.000000e+00> : vector<2x32xf32>
    %50 = tpu.matmul %47, %0, %cst_15 {dimension_numbers = #tpu.dot_dimension_numbers<[1], [0], [0], [1], [0, 0, 1, 1], [], []>} : vector<2x32xf32>, vector<32x32xf32>, vector<2x32xf32> -> vector<2x32xf32>
    %51 = arith.addf %49, %50 : vector<2x32xf32>
    %52 = math.tanh %51 : vector<2x32xf32>
    %c0_16 = arith.constant 0 : index
    %c0_17 = arith.constant 0 : index
    %53 = vector.load %arg5[%c0_16, %c0_17] : memref<2x32xf32, #tpu.memory_space<vmem>>, vector<2x32xf32>
    tpu.vector_store %arg5[%c0_16, %c0_17], %52 {strides = array<i32>} : memref<2x32xf32, #tpu.memory_space<vmem>>, vector<2x32xf32>,
    %54 = vector.shape_cast %17 : vector<2x32xf32> to vector<2x1x32xf32>
    %55 = vector.shape_cast %22 : vector<2x32xf32> to vector<2x1x32xf32>
    %56 = vector.shape_cast %27 : vector<2x32xf32> to vector<2x1x32xf32>
    %57 = vector.shape_cast %32 : vector<2x32xf32> to vector<2x1x32xf32>
    %58 = vector.shape_cast %37 : vector<2x32xf32> to vector<2x1x32xf32>
    %59 = vector.shape_cast %42 : vector<2x32xf32> to vector<2x1x32xf32>
    %60 = vector.shape_cast %47 : vector<2x32xf32> to vector<2x1x32xf32>
    %61 = vector.shape_cast %52 : vector<2x32xf32> to vector<2x1x32xf32>
    %62 = tpu.concatenate %54, %55, %56, %57, %58, %59, %60, %61 in 1 : vector<2x1x32xf32>, vector<2x1x32xf32>, vector<2x1x32xf32>, vector<2x1x32xf32>, vector<2x1x32xf32>, vector<2x1x32xf32>, vector<2x1x32xf32>, vector<2x1x32xf32> -> vector<2x8x32xf32>
    %63 = vector.shape_cast %3 : vector<1x32xf32> to vector<1x1x32xf32>
    %64 = vector.broadcast %63 : vector<1x1x32xf32> to vector<2x8x32xf32>
    %65 = arith.mulf %62, %64 : vector<2x8x32xf32>
    %cst_18 = arith.constant dense<0.000000e+00> : vector<2x8xf32>
    %66 = vector.multi_reduction <add>, %65, %cst_18 [2] : vector<2x8x32xf32> to vector<2x8xf32>
    %c0_19 = arith.constant 0 : index
    %67 = memref.load %arg3[%c0_19] : memref<1xf32, #tpu.memory_space<smem>>
    %68 = vector.broadcast %67 : f32 to vector<2x8xf32>
    %69 = arith.addf %66, %68 : vector<2x8xf32>
    %c0_20 = arith.constant 0 : index
    %c0_21 = arith.constant 0 : index
    %70 = vector.load %arg4[%c0_20, %c0_21] : memref<2x8xf32, #tpu.memory_space<vmem>>, vector<2x8xf32>
    tpu.vector_store %arg4[%c0_20, %c0_21], %69 {strides = array<i32>} : memref<2x8xf32, #tpu.memory_space<vmem>>, vector<2x8xf32>,
    return
  }
}

</mosaic_0001>

<llo_original>
// kernel: _forward.1
$region0: #{_forward.1}
  #allocation0 [shape = 'u32[]', space=smem, size = 0x4, offset = 0x4, fixed_abs, tag = 'smem constant byte address 0x4 - core index']
  #allocation1 [shape = 'u32[144,128]{1,0:T(1,128)}', space=vmem, size = 0x12000, scoped, tag = 'internal scratch']
  #allocation2 [shape = 'f32[1]{0:T(128)S(6)}', space=smem, size = 0x200, scoped, tag = 'scoped memory for _forward.1']
  %s0 = inlined_call_operand.vmem [shape: f32[2,8,1], index: 0, kind: input, shape index: {}]
  %s1 = inlined_call_operand.vmem [shape: f32[2,32], index: 1, kind: input, shape index: {}]
  %s2 = inlined_call_operand.vmem [shape: f32[35,32], index: 2, kind: input, shape index: {}]
  %s3 = inlined_call_operand.<no memory space> [shape: f32[1], index: 3, kind: input, shape index: {}]
  %s4 = inlined_call_operand.hbm [shape: f32[2,8], index: 4, kind: output, shape index: {0}]
  %s5 = inlined_call_operand.hbm [shape: f32[2,32], index: 5, kind: output, shape index: {1}]
  %6 = xla_tuple %s4, %s5
  %s7 = sld [smem:[#allocation0]]
  $region34: #{_forward.1} parent=0
    _
  %s9 = ssub.s32 1, %s7
  %s10 = scalar_select 0, %s9, %s7
  %11 = sst [smem:[#allocation2]] %s3
  $region1: #{_forward.1} parent=0
    #allocation3 [shape = 'u8[1024]{0}', space=vmem, size = 0x400, scoped, tag = 'output window, operand 0, single buffered']
    #allocation4 [shape = 's32[1]{0}', space=sflag, size = 0x4, scoped, tag = 'scoped memory for _forward.1']
    #allocation5 [shape = 'u8[1024]{0}', space=vmem, size = 0x400, scoped, tag = 'output window, operand 1, single buffered']
    #allocation6 [shape = 's32[1]{0}', space=sflag, size = 0x4, scoped, tag = 'scoped memory for _forward.1']
    %12 = vsyncpa [#allocation4], 0
    %13 = vsyncpa [#allocation6], 0
    // Predicated region
    $region2: #{_forward.1} parent=1 // pred_check
      _
    $region3: #{_forward.1} parent=1 // pred_check_branch
      %15 = sbr.rel (0) target = $region5
    $region4: #{_forward.1} parent=1 // pred_region
      _
    $region5: #{_forward.1} parent=1 // pred_fallthru
      _
    // Predicated region
    $region6: #{_forward.1} parent=1 // pred_check
      _
    $region7: #{_forward.1} parent=1 // pred_check_branch
      %17 = sbr.rel (0) target = $region9
    $region8: #{_forward.1} parent=1 // pred_region
      _
    $region9: #{_forward.1} parent=1 // pred_fallthru
      _
    // Predicated region
    $region10: #{_forward.1} parent=1 // pred_check
      _
    $region11: #{_forward.1} parent=1 // pred_check_branch
      %19 = sbr.rel (0) target = $region13
    $region12: #{_forward.1} parent=1 // pred_region
      _
    $region13: #{_forward.1} parent=1 // pred_fallthru
      _
    // Predicated region
    $region14: #{_forward.1} parent=1 // pred_check
      _
    $region15: #{_forward.1} parent=1 // pred_check_branch
      %21 = sbr.rel (0) target = $region17
    $region16: #{_forward.1} parent=1 // pred_region
      _
    $region17: #{_forward.1} parent=1 // pred_fallthru
      _
    %v22 = vld [vmem:[%s2] sm:$0xff]
    %v23 = vld [vmem:[%s2 + $0x8] sm:$0xff]
    %v24 = vld [vmem:[%s2 + $0x10] sm:$0xff]
    %v25 = vld [vmem:[%s2 + $0x18] sm:$0xff]
    %v26 = vld [vmem:[%s2 + $0x20] sm:$0x1]
    %v27 = vld [vmem:[%s2 + $0x21] sm:$0x1]
    %v28 = vld [vmem:[%s2 + $0x22] sm:$0x1]
    %v29 = vld [vmem:[%s0] sm:$0xff]
    %v30 = vld [vmem:[%s0 + $0x8] sm:$0xff]
    %32 = vset.pattern.permute.xlu0 0
    %33 = vperm.xlu0 %32, %v29
    %v34 = vpop.permute.xlu0 %33
    %37 = vset.pattern.permute.xlu0 0
    %38 = vperm.xlu0 %37, %v30
    %v39 = vpop.permute.xlu0 %38
    %v41 = vlaneseq
    %v42 = vshrl.u32 %v41, 7
    %v43 = vsub.s32 0, %v42
    %v44 = vrot.slane %v26, %v43
    %v45 = vmul.f32 %v34, %v44
    %v46 = vmul.f32 %v39, %v44
    %v47 = vlaneseq
    %v48 = vshrl.u32 %v47, 7
    %v49 = vsub.s32 0, %v48
    %v50 = vrot.slane %v27, %v49
    %v51 = vadd.f32 %v45, %v50
    %v52 = vadd.f32 %v46, %v50
    %v53 = vld [vmem:[%s1] sm:$0x3]
    %vm54 = vcmask 261120
    %v56 = vsel %vm54, %v53, 0
    %58 = vmatprep.subr.mxu0 0.0
    %59 = vmatpush1.msra.mxu0 %v22
    %60 = vmatprep.subr.mxu0 0.0
    %61 = vmatpush1.msra.mxu0 %v23
    %62 = vmatprep.subr.mxu0 0.0
    %63 = vmatpush1.msra.mxu0 %v24
    %64 = vmatprep.subr.mxu0 0.0
    %65 = vmatpush1.msra.mxu0 %v25
    %66 = vmatprep.subr.mxu0 0.0
    %67 = vmatpush1.msra.mxu0 0.0
    %68 = vmatprep.subr.mxu0 0.0
    %69 = vmatpush1.msra.mxu0 0.0
    %70 = vmatprep.subr.mxu0 0.0
    %71 = vmatpush1.msra.mxu0 0.0
    %72 = vmatprep.subr.mxu0 0.0
    %73 = vmatpush1.msra.mxu0 0.0
    %74 = vmatprep.subr.mxu0 0.0
    %75 = vmatpush1.msra.mxu0 0.0
    %76 = vmatprep.subr.mxu0 0.0
    %77 = vmatpush1.msra.mxu0 0.0
    %78 = vmatprep.subr.mxu0 0.0
    %79 = vmatpush1.msra.mxu0 0.0
    %80 = vmatprep.subr.mxu0 0.0
    %81 = vmatpush1.msra.mxu0 0.0
    %82 = vmatprep.subr.mxu0 0.0
    %83 = vmatpush1.msra.mxu0 0.0
    %84 = vmatprep.subr.mxu0 0.0
    %85 = vmatpush1.msra.mxu0 0.0
    %86 = vmatprep.subr.mxu0 0.0
    %87 = vmatpush1.msra.mxu0 0.0
    %88 = vmatprep.subr.mxu0 0.0
    %89 = vmatpush1.msra.mxu0 0.0
    %90 = vmatprep.subr.mxu0 0.0
    %91 = vmatpush1.msra.mxu0 0.0
    %92 = vmatprep.subr.mxu0 0.0
    %93 = vmatpush1.msra.mxu0 0.0
    %94 = vmatprep.subr.mxu0 0.0
    %95 = vmatpush1.msra.mxu0 0.0
    %96 = vmatprep.subr.mxu0 0.0
    %97 = vmatpush1.msra.mxu0 0.0
    %98 = vmatprep.subr.mxu0 0.0
    %99 = vmatpush1.msra.mxu0 0.0
    %100 = vmatprep.subr.mxu0 0.0
    %101 = vmatpush1.msra.mxu0 0.0
    %102 = vmatprep.subr.mxu0 0.0
    %103 = vmatpush1.msra.mxu0 0.0
    %104 = vmatprep.subr.mxu0 0.0
    %105 = vmatpush1.msra.mxu0 0.0
    %106 = vmatprep.subr.mxu0 0.0
    %107 = vmatpush1.msra.mxu0 0.0
    %108 = vmatprep.subr.mxu0 0.0
    %109 = vmatpush1.msra.mxu0 0.0
    %110 = vmatprep.subr.mxu0 0.0
    %111 = vmatpush1.msra.mxu0 0.0
    %112 = vmatprep.subr.mxu0 0.0
    %113 = vmatpush1.msra.mxu0 0.0
    %114 = vmatprep.subr.mxu0 0.0
    %115 = vmatpush1.msra.mxu0 0.0
    %116 = vmatprep.subr.mxu0 0.0
    %117 = vmatpush1.msra.mxu0 0.0
    %118 = vmatprep.subr.mxu0 0.0
    %119 = vmatpush1.msra.mxu0 0.0
    %120 = vmatprep.subr.mxu0 0.0
    %121 = vmatpush1.msra.mxu0 0.0
    %122 = vmatprep.mubr.f32.mxu0 0.0
    %123 = vmatmul.mubr.f32.gmra.mrb[0].mxu0 %v56
    %v124 = vpop.f32.mrb[0].mxu0
    %v125 = vadd.f32 0.0, %v124
    %v126 = vpop.f32.mrb[0].mxu0
    %127 = vdwg.mxu0
    %v129 = vrot.slane %v125, 1
    %v132 = vadd.f32 %v51, %v125
    %v133 = vadd.f32 %v52, %v129
    %v134 = vtanh.pop %v132
    %v135 = vtanh.pop %v133
    %v138 = vrot.slane %v135, 7
    %vm139 = vcmask 1041409
    %v140 = vsel %vm139, %v138, %v134
    %v141 = vsel %vm54, %v140, 0
    %143 = vmatprep.subr.mxu0 0.0
    %144 = vmatpush1.msra.mxu0 %v22
    %145 = vmatprep.subr.mxu0 0.0
    %146 = vmatpush1.msra.mxu0 %v23
    %147 = vmatprep.subr.mxu0 0.0
    %148 = vmatpush1.msra.mxu0 %v24
    %149 = vmatprep.subr.mxu0 0.0
    %150 = vmatpush1.msra.mxu0 %v25
    %151 = vmatprep.subr.mxu0 0.0
    %152 = vmatpush1.msra.mxu0 0.0
    %153 = vmatprep.subr.mxu0 0.0
    %154 = vmatpush1.msra.mxu0 0.0
    %155 = vmatprep.subr.mxu0 0.0
    %156 = vmatpush1.msra.mxu0 0.0
    %157 = vmatprep.subr.mxu0 0.0
    %158 = vmatpush1.msra.mxu0 0.0
    %159 = vmatprep.subr.mxu0 0.0
    %160 = vmatpush1.msra.mxu0 0.0
    %161 = vmatprep.subr.mxu0 0.0
    %162 = vmatpush1.msra.mxu0 0.0
    %163 = vmatprep.subr.mxu0 0.0
    %164 = vmatpush1.msra.mxu0 0.0
    %165 = vmatprep.subr.mxu0 0.0
    %166 = vmatpush1.msra.mxu0 0.0
    %167 = vmatprep.subr.mxu0 0.0
    %168 = vmatpush1.msra.mxu0 0.0
    %169 = vmatprep.subr.mxu0 0.0
    %170 = vmatpush1.msra.mxu0 0.0
    %171 = vmatprep.subr.mxu0 0.0
    %172 = vmatpush1.msra.mxu0 0.0
    %173 = vmatprep.subr.mxu0 0.0
    %174 = vmatpush1.msra.mxu0 0.0
    %175 = vmatprep.subr.mxu0 0.0
    %176 = vmatpush1.msra.mxu0 0.0
    %177 = vmatprep.subr.mxu0 0.0
    %178 = vmatpush1.msra.mxu0 0.0
    %179 = vmatprep.subr.mxu0 0.0
    %180 = vmatpush1.msra.mxu0 0.0
    %181 = vmatprep.subr.mxu0 0.0
    %182 = vmatpush1.msra.mxu0 0.0
    %183 = vmatprep.subr.mxu0 0.0
    %184 = vmatpush1.msra.mxu0 0.0
    %185 = vmatprep.subr.mxu0 0.0
    %186 = vmatpush1.msra.mxu0 0.0
    %187 = vmatprep.subr.mxu0 0.0
    %188 = vmatpush1.msra.mxu0 0.0
    %189 = vmatprep.subr.mxu0 0.0
    %190 = vmatpush1.msra.mxu0 0.0
    %191 = vmatprep.subr.mxu0 0.0
    %192 = vmatpush1.msra.mxu0 0.0
    %193 = vmatprep.subr.mxu0 0.0
    %194 = vmatpush1.msra.mxu0 0.0
    %195 = vmatprep.subr.mxu0 0.0
    %196 = vmatpush1.msra.mxu0 0.0
    %197 = vmatprep.subr.mxu0 0.0
    %198 = vmatpush1.msra.mxu0 0.0
    %199 = vmatprep.subr.mxu0 0.0
    %200 = vmatpush1.msra.mxu0 0.0
    %201 = vmatprep.subr.mxu0 0.0
    %202 = vmatpush1.msra.mxu0 0.0
    %203 = vmatprep.subr.mxu0 0.0
    %204 = vmatpush1.msra.mxu0 0.0
    %205 = vmatprep.subr.mxu0 0.0
    %206 = vmatpush1.msra.mxu0 0.0
    %207 = vmatprep.mubr.f32.mxu0 0.0
    %208 = vmatmul.mubr.f32.gmra.mrb[0].mxu0 %v141
    %v209 = vpop.f32.mrb[0].mxu0
    %v210 = vadd.f32 0.0, %v209
    %v211 = vpop.f32.mrb[0].mxu0
    %212 = vdwg.mxu0
    %v214 = vrot.slane %v210, 7
    %v217 = vadd.f32 %v51, %v214
    %v218 = vadd.f32 %v52, %v210
    %v219 = vtanh.pop %v217
    %v220 = vtanh.pop %v218
    %v223 = vrot.slane %v219, 1
    %v224 = vsel %vm139, %v220, %v223
    %v225 = vsel %vm54, %v224, 0
    %227 = vmatprep.subr.mxu0 0.0
    %228 = vmatpush1.msra.mxu0 %v22
    %229 = vmatprep.subr.mxu0 0.0
    %230 = vmatpush1.msra.mxu0 %v23
    %231 = vmatprep.subr.mxu0 0.0
    %232 = vmatpush1.msra.mxu0 %v24
    %233 = vmatprep.subr.mxu0 0.0
    %234 = vmatpush1.msra.mxu0 %v25
    %235 = vmatprep.subr.mxu0 0.0
    %236 = vmatpush1.msra.mxu0 0.0
    %237 = vmatprep.subr.mxu0 0.0
    %238 = vmatpush1.msra.mxu0 0.0
    %239 = vmatprep.subr.mxu0 0.0
    %240 = vmatpush1.msra.mxu0 0.0
    %241 = vmatprep.subr.mxu0 0.0
    %242 = vmatpush1.msra.mxu0 0.0
    %243 = vmatprep.subr.mxu0 0.0
    %244 = vmatpush1.msra.mxu0 0.0
    %245 = vmatprep.subr.mxu0 0.0
    %246 = vmatpush1.msra.mxu0 0.0
    %247 = vmatprep.subr.mxu0 0.0
    %248 = vmatpush1.msra.mxu0 0.0
    %249 = vmatprep.subr.mxu0 0.0
    %250 = vmatpush1.msra.mxu0 0.0
    %251 = vmatprep.subr.mxu0 0.0
    %252 = vmatpush1.msra.mxu0 0.0
    %253 = vmatprep.subr.mxu0 0.0
    %254 = vmatpush1.msra.mxu0 0.0
    %255 = vmatprep.subr.mxu0 0.0
    %256 = vmatpush1.msra.mxu0 0.0
    %257 = vmatprep.subr.mxu0 0.0
    %258 = vmatpush1.msra.mxu0 0.0
    %259 = vmatprep.subr.mxu0 0.0
    %260 = vmatpush1.msra.mxu0 0.0
    %261 = vmatprep.subr.mxu0 0.0
    %262 = vmatpush1.msra.mxu0 0.0
    %263 = vmatprep.subr.mxu0 0.0
    %264 = vmatpush1.msra.mxu0 0.0
    %265 = vmatprep.subr.mxu0 0.0
    %266 = vmatpush1.msra.mxu0 0.0
    %267 = vmatprep.subr.mxu0 0.0
    %268 = vmatpush1.msra.mxu0 0.0
    %269 = vmatprep.subr.mxu0 0.0
    %270 = vmatpush1.msra.mxu0 0.0
    %271 = vmatprep.subr.mxu0 0.0
    %272 = vmatpush1.msra.mxu0 0.0
    %273 = vmatprep.subr.mxu0 0.0
    %274 = vmatpush1.msra.mxu0 0.0
    %275 = vmatprep.subr.mxu0 0.0
    %276 = vmatpush1.msra.mxu0 0.0
    %277 = vmatprep.subr.mxu0 0.0
    %278 = vmatpush1.msra.mxu0 0.0
    %279 = vmatprep.subr.mxu0 0.0
    %280 = vmatpush1.msra.mxu0 0.0
    %281 = vmatprep.subr.mxu0 0.0
    %282 = vmatpush1.msra.mxu0 0.0
    %283 = vmatprep.subr.mxu0 0.0
    %284 = vmatpush1.msra.mxu0 0.0
    %285 = vmatprep.subr.mxu0 0.0
    %286 = vmatpush1.msra.mxu0 0.0
    %287 = vmatprep.subr.mxu0 0.0
    %288 = vmatpush1.msra.mxu0 0.0
    %289 = vmatprep.subr.mxu0 0.0
    %290 = vmatpush1.msra.mxu0 0.0
    %291 = vmatprep.mubr.f32.mxu0 0.0
    %292 = vmatmul.mubr.f32.gmra.mrb[0].mxu0 %v225
    %v293 = vpop.f32.mrb[0].mxu0
    %v294 = vadd.f32 0.0, %v293
    %v295 = vpop.f32.mrb[0].mxu0
    %296 = vdwg.mxu0
    %v298 = vrot.slane %v294, 6
    %v299 = vrot.slane %v294, 7
    %v302 = vadd.f32 %v51, %v298
    %v303 = vadd.f32 %v52, %v299
    %v304 = vtanh.pop %v302
    %v305 = vtanh.pop %v303
    %v308 = vrot.slane %v304, 2
    %v309 = vrot.slane %v305, 1
    %v310 = vsel %vm139, %v309, %v308
    %v311 = vsel %vm54, %v310, 0
    %313 = vmatprep.subr.mxu0 0.0
    %314 = vmatpush1.msra.mxu0 %v22
    %315 = vmatprep.subr.mxu0 0.0
    %316 = vmatpush1.msra.mxu0 %v23
    %317 = vmatprep.subr.mxu0 0.0
    %318 = vmatpush1.msra.mxu0 %v24
    %319 = vmatprep.subr.mxu0 0.0
    %320 = vmatpush1.msra.mxu0 %v25
    %321 = vmatprep.subr.mxu0 0.0
    %322 = vmatpush1.msra.mxu0 0.0
    %323 = vmatprep.subr.mxu0 0.0
    %324 = vmatpush1.msra.mxu0 0.0
    %325 = vmatprep.subr.mxu0 0.0
    %326 = vmatpush1.msra.mxu0 0.0
    %327 = vmatprep.subr.mxu0 0.0
    %328 = vmatpush1.msra.mxu0 0.0
    %329 = vmatprep.subr.mxu0 0.0
    %330 = vmatpush1.msra.mxu0 0.0
    %331 = vmatprep.subr.mxu0 0.0
    %332 = vmatpush1.msra.mxu0 0.0
    %333 = vmatprep.subr.mxu0 0.0
    %334 = vmatpush1.msra.mxu0 0.0
    %335 = vmatprep.subr.mxu0 0.0
    %336 = vmatpush1.msra.mxu0 0.0
    %337 = vmatprep.subr.mxu0 0.0
    %338 = vmatpush1.msra.mxu0 0.0
    %339 = vmatprep.subr.mxu0 0.0
    %340 = vmatpush1.msra.mxu0 0.0
    %341 = vmatprep.subr.mxu0 0.0
    %342 = vmatpush1.msra.mxu0 0.0
    %343 = vmatprep.subr.mxu0 0.0
    %344 = vmatpush1.msra.mxu0 0.0
    %345 = vmatprep.subr.mxu0 0.0
    %346 = vmatpush1.msra.mxu0 0.0
    %347 = vmatprep.subr.mxu0 0.0
    %348 = vmatpush1.msra.mxu0 0.0
    %349 = vmatprep.subr.mxu0 0.0
    %350 = vmatpush1.msra.mxu0 0.0
    %351 = vmatprep.subr.mxu0 0.0
    %352 = vmatpush1.msra.mxu0 0.0
    %353 = vmatprep.subr.mxu0 0.0
    %354 = vmatpush1.msra.mxu0 0.0
    %355 = vmatprep.subr.mxu0 0.0
    %356 = vmatpush1.msra.mxu0 0.0
    %357 = vmatprep.subr.mxu0 0.0
    %358 = vmatpush1.msra.mxu0 0.0
    %359 = vmatprep.subr.mxu0 0.0
    %360 = vmatpush1.msra.mxu0 0.0
    %361 = vmatprep.subr.mxu0 0.0
    %362 = vmatpush1.msra.mxu0 0.0
    %363 = vmatprep.subr.mxu0 0.0
    %364 = vmatpush1.msra.mxu0 0.0
    %365 = vmatprep.subr.mxu0 0.0
    %366 = vmatpush1.msra.mxu0 0.0
    %367 = vmatprep.subr.mxu0 0.0
    %368 = vmatpush1.msra.mxu0 0.0
    %369 = vmatprep.subr.mxu0 0.0
    %370 = vmatpush1.msra.mxu0 0.0
    %371 = vmatprep.subr.mxu0 0.0
    %372 = vmatpush1.msra.mxu0 0.0
    %373 = vmatprep.subr.mxu0 0.0
    %374 = vmatpush1.msra.mxu0 0.0
    %375 = vmatprep.subr.mxu0 0.0
    %376 = vmatpush1.msra.mxu0 0.0
    %377 = vmatprep.mubr.f32.mxu0 0.0
    %378 = vmatmul.mubr.f32.gmra.mrb[0].mxu0 %v311
    %v379 = vpop.f32.mrb[0].mxu0
    %v380 = vadd.f32 0.0, %v379
    %v381 = vpop.f32.mrb[0].mxu0
    %382 = vdwg.mxu0
    %v384 = vrot.slane %v380, 5
    %v385 = vrot.slane %v380, 6
    %v388 = vadd.f32 %v51, %v384
    %v389 = vadd.f32 %v52, %v385
    %v390 = vtanh.pop %v388
    %v391 = vtanh.pop %v389
    %v394 = vrot.slane %v390, 3
    %v395 = vrot.slane %v391, 2
    %v396 = vsel %vm139, %v395, %v394
    %v397 = vsel %vm54, %v396, 0
    %399 = vmatprep.subr.mxu0 0.0
    %400 = vmatpush1.msra.mxu0 %v22
    %401 = vmatprep.subr.mxu0 0.0
    %402 = vmatpush1.msra.mxu0 %v23
    %403 = vmatprep.subr.mxu0 0.0
    %404 = vmatpush1.msra.mxu0 %v24
    %405 = vmatprep.subr.mxu0 0.0
    %406 = vmatpush1.msra.mxu0 %v25
    %407 = vmatprep.subr.mxu0 0.0
    %408 = vmatpush1.msra.mxu0 0.0
    %409 = vmatprep.subr.mxu0 0.0
    %410 = vmatpush1.msra.mxu0 0.0
    %411 = vmatprep.subr.mxu0 0.0
    %412 = vmatpush1.msra.mxu0 0.0
    %413 = vmatprep.subr.mxu0 0.0
    %414 = vmatpush1.msra.mxu0 0.0
    %415 = vmatprep.subr.mxu0 0.0
    %416 = vmatpush1.msra.mxu0 0.0
    %417 = vmatprep.subr.mxu0 0.0
    %418 = vmatpush1.msra.mxu0 0.0
    %419 = vmatprep.subr.mxu0 0.0
    %420 = vmatpush1.msra.mxu0 0.0
    %421 = vmatprep.subr.mxu0 0.0
    %422 = vmatpush1.msra.mxu0 0.0
    %423 = vmatprep.subr.mxu0 0.0
    %424 = vmatpush1.msra.mxu0 0.0
    %425 = vmatprep.subr.mxu0 0.0
    %426 = vmatpush1.msra.mxu0 0.0
    %427 = vmatprep.subr.mxu0 0.0
    %428 = vmatpush1.msra.mxu0 0.0
    %429 = vmatprep.subr.mxu0 0.0
    %430 = vmatpush1.msra.mxu0 0.0
    %431 = vmatprep.subr.mxu0 0.0
    %432 = vmatpush1.msra.mxu0 0.0
    %433 = vmatprep.subr.mxu0 0.0
    %434 = vmatpush1.msra.mxu0 0.0
    %435 = vmatprep.subr.mxu0 0.0
    %436 = vmatpush1.msra.mxu0 0.0
    %437 = vmatprep.subr.mxu0 0.0
    %438 = vmatpush1.msra.mxu0 0.0
    %439 = vmatprep.subr.mxu0 0.0
    %440 = vmatpush1.msra.mxu0 0.0
    %441 = vmatprep.subr.mxu0 0.0
    %442 = vmatpush1.msra.mxu0 0.0
    %443 = vmatprep.subr.mxu0 0.0
    %444 = vmatpush1.msra.mxu0 0.0
    %445 = vmatprep.subr.mxu0 0.0
    %446 = vmatpush1.msra.mxu0 0.0
    %447 = vmatprep.subr.mxu0 0.0
    %448 = vmatpush1.msra.mxu0 0.0
    %449 = vmatprep.subr.mxu0 0.0
    %450 = vmatpush1.msra.mxu0 0.0
    %451 = vmatprep.subr.mxu0 0.0
    %452 = vmatpush1.msra.mxu0 0.0
    %453 = vmatprep.subr.mxu0 0.0
    %454 = vmatpush1.msra.mxu0 0.0
    %455 = vmatprep.subr.mxu0 0.0
    %456 = vmatpush1.msra.mxu0 0.0
    %457 = vmatprep.subr.mxu0 0.0
    %458 = vmatpush1.msra.mxu0 0.0
    %459 = vmatprep.subr.mxu0 0.0
    %460 = vmatpush1.msra.mxu0 0.0
    %461 = vmatprep.subr.mxu0 0.0
    %462 = vmatpush1.msra.mxu0 0.0
    %463 = vmatprep.mubr.f32.mxu0 0.0
    %464 = vmatmul.mubr.f32.gmra.mrb[0].mxu0 %v397
    %v465 = vpop.f32.mrb[0].mxu0
    %v466 = vadd.f32 0.0, %v465
    %v467 = vpop.f32.mrb[0].mxu0
    %468 = vdwg.mxu0
    %v470 = vrot.slane %v466, 4
    %v471 = vrot.slane %v466, 5
    %v474 = vadd.f32 %v51, %v470
    %v475 = vadd.f32 %v52, %v471
    %v476 = vtanh.pop %v474
    %v477 = vtanh.pop %v475
    %v480 = vrot.slane %v476, 4
    %v481 = vrot.slane %v477, 3
    %v482 = vsel %vm139, %v481, %v480
    %v483 = vsel %vm54, %v482, 0
    %485 = vmatprep.subr.mxu0 0.0
    %486 = vmatpush1.msra.mxu0 %v22
    %487 = vmatprep.subr.mxu0 0.0
    %488 = vmatpush1.msra.mxu0 %v23
    %489 = vmatprep.subr.mxu0 0.0
    %490 = vmatpush1.msra.mxu0 %v24
    %491 = vmatprep.subr.mxu0 0.0
    %492 = vmatpush1.msra.mxu0 %v25
    %493 = vmatprep.subr.mxu0 0.0
    %494 = vmatpush1.msra.mxu0 0.0
    %495 = vmatprep.subr.mxu0 0.0
    %496 = vmatpush1.msra.mxu0 0.0
    %497 = vmatprep.subr.mxu0 0.0
    %498 = vmatpush1.msra.mxu0 0.0
    %499 = vmatprep.subr.mxu0 0.0
    %500 = vmatpush1.msra.mxu0 0.0
    %501 = vmatprep.subr.mxu0 0.0
    %502 = vmatpush1.msra.mxu0 0.0
    %503 = vmatprep.subr.mxu0 0.0
    %504 = vmatpush1.msra.mxu0 0.0
    %505 = vmatprep.subr.mxu0 0.0
    %506 = vmatpush1.msra.mxu0 0.0
    %507 = vmatprep.subr.mxu0 0.0
    %508 = vmatpush1.msra.mxu0 0.0
    %509 = vmatprep.subr.mxu0 0.0
    %510 = vmatpush1.msra.mxu0 0.0
    %511 = vmatprep.subr.mxu0 0.0
    %512 = vmatpush1.msra.mxu0 0.0
    %513 = vmatprep.subr.mxu0 0.0
    %514 = vmatpush1.msra.mxu0 0.0
    %515 = vmatprep.subr.mxu0 0.0
    %516 = vmatpush1.msra.mxu0 0.0
    %517 = vmatprep.subr.mxu0 0.0
    %518 = vmatpush1.msra.mxu0 0.0
    %519 = vmatprep.subr.mxu0 0.0
    %520 = vmatpush1.msra.mxu0 0.0
    %521 = vmatprep.subr.mxu0 0.0
    %522 = vmatpush1.msra.mxu0 0.0
    %523 = vmatprep.subr.mxu0 0.0
    %524 = vmatpush1.msra.mxu0 0.0
    %525 = vmatprep.subr.mxu0 0.0
    %526 = vmatpush1.msra.mxu0 0.0
    %527 = vmatprep.subr.mxu0 0.0
    %528 = vmatpush1.msra.mxu0 0.0
    %529 = vmatprep.subr.mxu0 0.0
    %530 = vmatpush1.msra.mxu0 0.0
    %531 = vmatprep.subr.mxu0 0.0
    %532 = vmatpush1.msra.mxu0 0.0
    %533 = vmatprep.subr.mxu0 0.0
    %534 = vmatpush1.msra.mxu0 0.0
    %535 = vmatprep.subr.mxu0 0.0
    %536 = vmatpush1.msra.mxu0 0.0
    %537 = vmatprep.subr.mxu0 0.0
    %538 = vmatpush1.msra.mxu0 0.0
    %539 = vmatprep.subr.mxu0 0.0
    %540 = vmatpush1.msra.mxu0 0.0
    %541 = vmatprep.subr.mxu0 0.0
    %542 = vmatpush1.msra.mxu0 0.0
    %543 = vmatprep.subr.mxu0 0.0
    %544 = vmatpush1.msra.mxu0 0.0
    %545 = vmatprep.subr.mxu0 0.0
    %546 = vmatpush1.msra.mxu0 0.0
    %547 = vmatprep.subr.mxu0 0.0
    %548 = vmatpush1.msra.mxu0 0.0
    %549 = vmatprep.mubr.f32.mxu0 0.0
    %550 = vmatmul.mubr.f32.gmra.mrb[0].mxu0 %v483
    %v551 = vpop.f32.mrb[0].mxu0
    %v552 = vadd.f32 0.0, %v551
    %v553 = vpop.f32.mrb[0].mxu0
    %554 = vdwg.mxu0
    %v556 = vrot.slane %v552, 3
    %v557 = vrot.slane %v552, 4
    %v560 = vadd.f32 %v51, %v556
    %v561 = vadd.f32 %v52, %v557
    %v562 = vtanh.pop %v560
    %v563 = vtanh.pop %v561
    %v566 = vrot.slane %v562, 5
    %v567 = vrot.slane %v563, 4
    %v568 = vsel %vm139, %v567, %v566
    %v569 = vsel %vm54, %v568, 0
    %571 = vmatprep.subr.mxu0 0.0
    %572 = vmatpush1.msra.mxu0 %v22
    %573 = vmatprep.subr.mxu0 0.0
    %574 = vmatpush1.msra.mxu0 %v23
    %575 = vmatprep.subr.mxu0 0.0
    %576 = vmatpush1.msra.mxu0 %v24
    %577 = vmatprep.subr.mxu0 0.0
    %578 = vmatpush1.msra.mxu0 %v25
    %579 = vmatprep.subr.mxu0 0.0
    %580 = vmatpush1.msra.mxu0 0.0
    %581 = vmatprep.subr.mxu0 0.0
    %582 = vmatpush1.msra.mxu0 0.0
    %583 = vmatprep.subr.mxu0 0.0
    %584 = vmatpush1.msra.mxu0 0.0
    %585 = vmatprep.subr.mxu0 0.0
    %586 = vmatpush1.msra.mxu0 0.0
    %587 = vmatprep.subr.mxu0 0.0
    %588 = vmatpush1.msra.mxu0 0.0
    %589 = vmatprep.subr.mxu0 0.0
    %590 = vmatpush1.msra.mxu0 0.0
    %591 = vmatprep.subr.mxu0 0.0
    %592 = vmatpush1.msra.mxu0 0.0
    %593 = vmatprep.subr.mxu0 0.0
    %594 = vmatpush1.msra.mxu0 0.0
    %595 = vmatprep.subr.mxu0 0.0
    %596 = vmatpush1.msra.mxu0 0.0
    %597 = vmatprep.subr.mxu0 0.0
    %598 = vmatpush1.msra.mxu0 0.0
    %599 = vmatprep.subr.mxu0 0.0
    %600 = vmatpush1.msra.mxu0 0.0
    %601 = vmatprep.subr.mxu0 0.0
    %602 = vmatpush1.msra.mxu0 0.0
    %603 = vmatprep.subr.mxu0 0.0
    %604 = vmatpush1.msra.mxu0 0.0
    %605 = vmatprep.subr.mxu0 0.0
    %606 = vmatpush1.msra.mxu0 0.0
    %607 = vmatprep.subr.mxu0 0.0
    %608 = vmatpush1.msra.mxu0 0.0
    %609 = vmatprep.subr.mxu0 0.0
    %610 = vmatpush1.msra.mxu0 0.0
    %611 = vmatprep.subr.mxu0 0.0
    %612 = vmatpush1.msra.mxu0 0.0
    %613 = vmatprep.subr.mxu0 0.0
    %614 = vmatpush1.msra.mxu0 0.0
    %615 = vmatprep.subr.mxu0 0.0
    %616 = vmatpush1.msra.mxu0 0.0
    %617 = vmatprep.subr.mxu0 0.0
    %618 = vmatpush1.msra.mxu0 0.0
    %619 = vmatprep.subr.mxu0 0.0
    %620 = vmatpush1.msra.mxu0 0.0
    %621 = vmatprep.subr.mxu0 0.0
    %622 = vmatpush1.msra.mxu0 0.0
    %623 = vmatprep.subr.mxu0 0.0
    %624 = vmatpush1.msra.mxu0 0.0
    %625 = vmatprep.subr.mxu0 0.0
    %626 = vmatpush1.msra.mxu0 0.0
    %627 = vmatprep.subr.mxu0 0.0
    %628 = vmatpush1.msra.mxu0 0.0
    %629 = vmatprep.subr.mxu0 0.0
    %630 = vmatpush1.msra.mxu0 0.0
    %631 = vmatprep.subr.mxu0 0.0
    %632 = vmatpush1.msra.mxu0 0.0
    %633 = vmatprep.subr.mxu0 0.0
    %634 = vmatpush1.msra.mxu0 0.0
    %635 = vmatprep.mubr.f32.mxu0 0.0
    %636 = vmatmul.mubr.f32.gmra.mrb[0].mxu0 %v569
    %v637 = vpop.f32.mrb[0].mxu0
    %v638 = vadd.f32 0.0, %v637
    %v639 = vpop.f32.mrb[0].mxu0
    %640 = vdwg.mxu0
    %v642 = vrot.slane %v638, 2
    %v643 = vrot.slane %v638, 3
    %v646 = vadd.f32 %v51, %v642
    %v647 = vadd.f32 %v52, %v643
    %v648 = vtanh.pop %v646
    %v649 = vtanh.pop %v647
    %v652 = vrot.slane %v648, 6
    %v653 = vrot.slane %v649, 5
    %v654 = vsel %vm139, %v653, %v652
    %v655 = vsel %vm54, %v654, 0
    %657 = vmatprep.subr.mxu0 0.0
    %658 = vmatpush1.msra.mxu0 %v22
    %659 = vmatprep.subr.mxu0 0.0
    %660 = vmatpush1.msra.mxu0 %v23
    %661 = vmatprep.subr.mxu0 0.0
    %662 = vmatpush1.msra.mxu0 %v24
    %663 = vmatprep.subr.mxu0 0.0
    %664 = vmatpush1.msra.mxu0 %v25
    %665 = vmatprep.subr.mxu0 0.0
    %666 = vmatpush1.msra.mxu0 0.0
    %667 = vmatprep.subr.mxu0 0.0
    %668 = vmatpush1.msra.mxu0 0.0
    %669 = vmatprep.subr.mxu0 0.0
    %670 = vmatpush1.msra.mxu0 0.0
    %671 = vmatprep.subr.mxu0 0.0
    %672 = vmatpush1.msra.mxu0 0.0
    %673 = vmatprep.subr.mxu0 0.0
    %674 = vmatpush1.msra.mxu0 0.0
    %675 = vmatprep.subr.mxu0 0.0
    %676 = vmatpush1.msra.mxu0 0.0
    %677 = vmatprep.subr.mxu0 0.0
    %678 = vmatpush1.msra.mxu0 0.0
    %679 = vmatprep.subr.mxu0 0.0
    %680 = vmatpush1.msra.mxu0 0.0
    %681 = vmatprep.subr.mxu0 0.0
    %682 = vmatpush1.msra.mxu0 0.0
    %683 = vmatprep.subr.mxu0 0.0
    %684 = vmatpush1.msra.mxu0 0.0
    %685 = vmatprep.subr.mxu0 0.0
    %686 = vmatpush1.msra.mxu0 0.0
    %687 = vmatprep.subr.mxu0 0.0
    %688 = vmatpush1.msra.mxu0 0.0
    %689 = vmatprep.subr.mxu0 0.0
    %690 = vmatpush1.msra.mxu0 0.0
    %691 = vmatprep.subr.mxu0 0.0
    %692 = vmatpush1.msra.mxu0 0.0
    %693 = vmatprep.subr.mxu0 0.0
    %694 = vmatpush1.msra.mxu0 0.0
    %695 = vmatprep.subr.mxu0 0.0
    %696 = vmatpush1.msra.mxu0 0.0
    %697 = vmatprep.subr.mxu0 0.0
    %698 = vmatpush1.msra.mxu0 0.0
    %699 = vmatprep.subr.mxu0 0.0
    %700 = vmatpush1.msra.mxu0 0.0
    %701 = vmatprep.subr.mxu0 0.0
    %702 = vmatpush1.msra.mxu0 0.0
    %703 = vmatprep.subr.mxu0 0.0
    %704 = vmatpush1.msra.mxu0 0.0
    %705 = vmatprep.subr.mxu0 0.0
    %706 = vmatpush1.msra.mxu0 0.0
    %707 = vmatprep.subr.mxu0 0.0
    %708 = vmatpush1.msra.mxu0 0.0
    %709 = vmatprep.subr.mxu0 0.0
    %710 = vmatpush1.msra.mxu0 0.0
    %711 = vmatprep.subr.mxu0 0.0
    %712 = vmatpush1.msra.mxu0 0.0
    %713 = vmatprep.subr.mxu0 0.0
    %714 = vmatpush1.msra.mxu0 0.0
    %715 = vmatprep.subr.mxu0 0.0
    %716 = vmatpush1.msra.mxu0 0.0
    %717 = vmatprep.subr.mxu0 0.0
    %718 = vmatpush1.msra.mxu0 0.0
    %719 = vmatprep.subr.mxu0 0.0
    %720 = vmatpush1.msra.mxu0 0.0
    %721 = vmatprep.mubr.f32.mxu0 0.0
    %722 = vmatmul.mubr.f32.gmra.mrb[0].mxu0 %v655
    %v723 = vpop.f32.mrb[0].mxu0
    %v724 = vadd.f32 0.0, %v723
    %v725 = vpop.f32.mrb[0].mxu0
    %726 = vdwg.mxu0
    %v728 = vrot.slane %v724, 1
    %v729 = vrot.slane %v724, 2
    %v732 = vadd.f32 %v51, %v728
    %v733 = vadd.f32 %v52, %v729
    %v734 = vtanh.pop %v732
    %v735 = vtanh.pop %v733
    %v738 = vrot.slane %v735, 7
    %vm741 = vcmask 261127
    %742 = vst.msk [vmem:[#allocation5 - $0x7] sm:$0x80] %vm741, %v734
    %vm743 = vcmask 253952
    %744 = vst.msk [vmem:[#allocation5 + $0x1] sm:$0x1] %vm743, %v738
    %vm745 = vcmask 1040384
    %v746 = vsel %vm745, %v134, %v219
    %v747 = vsel %vm745, %v135, %v220
    %vm748 = vcmask 1041408
    %v749 = vsel %vm748, %v746, %v304
    %v750 = vsel %vm748, %v747, %v305
    %vm751 = vcmask 1042432
    %v752 = vsel %vm751, %v749, %v390
    %v753 = vsel %vm751, %v750, %v391
    %vm754 = vcmask 1043456
    %v755 = vsel %vm754, %v752, %v476
    %v756 = vsel %vm754, %v753, %v477
    %vm757 = vcmask 1044480
    %v758 = vsel %vm757, %v755, %v562
    %v759 = vsel %vm757, %v756, %v563
    %vm760 = vcmask 1045504
    %v761 = vsel %vm760, %v758, %v648
    %v762 = vsel %vm760, %v759, %v649
    %vm763 = vcmask 1046528
    %v764 = vsel %vm763, %v761, %v734
    %v765 = vsel %vm763, %v762, %v735
    %v766 = vlaneseq
    %v767 = vshrl.u32 %v766, 7
    %v768 = vsub.s32 0, %v767
    %v769 = vrot.slane %v28, %v768
    %v770 = vmul.f32 %v764, %v769
    %v771 = vmul.f32 %v765, %v769
    %v772 = vsel %vm54, %v770, 0.0
    %773 = vadd.xlane.f32.xlu0 %v772
    %v774 = vpop.xlane.xlu0 %773
    %v775 = vsel %vm54, %v771, 0.0
    %776 = vadd.xlane.f32.xlu0 %v775
    %v777 = vpop.xlane.xlu0 %776
    %s778 = sld [smem:[#allocation2]]
    %v779 = vstv %s778
    %v780 = vadd.f32 %v774, %v779
    %v781 = vadd.f32 %v777, %v779
    %v784 = vlaneseq
    %v785 = vand.u32 %v784, 127
    %v786 = vlaneseq
    %v787 = vshrl.u32 %v786, 7
    %v788 = vsub.s32 %v785, %v787
    %v789 = vrot.slane %v780, %v788
    %v790 = vlaneseq
    %v791 = vshrl.u32 %v790, 7
    %v792 = vsub.s32 %v785, %v791
    %v793 = vrot.slane %v781, %v792
    %v794 = vsel %vm139, %v793, %v789
    %vm796 = vcmask 58368
    %797 = vst.msk [vmem:[#allocation3] sm:$0x3] %vm796, %v794
    // Predicated region
    $region18: #{_forward.1} parent=1 // pred_check
      _
    $region19: #{_forward.1} parent=1 // pred_check_branch
      %799 = sbr.rel (0) target = $region21
    $region20: #{_forward.1} parent=1 // pred_region
      %s801 = ssub.s32 32, 32
      %802 = vsyncadd [#allocation4], %s801
      %s804 = sshll.u32 [#allocation3], 4
      %s805 = int_to_ptr.vmem [resolvable:$true] %s804
      %807 = dma.vmem_to_hbm [thread:$0]  %s805, 32, %s4, [#allocation4]
    $region21: #{_forward.1} parent=1 // pred_fallthru
      _
    // Predicated region
    $region22: #{_forward.1} parent=1 // pred_check
      _
    $region23: #{_forward.1} parent=1 // pred_check_branch
      %809 = sbr.rel (0) target = $region25
    $region24: #{_forward.1} parent=1 // pred_region
      %s811 = ssub.s32 32, 32
      %812 = vsyncadd [#allocation6], %s811
      %s814 = sshll.u32 [#allocation5], 4
      %s815 = int_to_ptr.vmem [resolvable:$true] %s814
      %817 = dma.vmem_to_hbm [thread:$0]  %s815, 32, %s5, [#allocation6]
    $region25: #{_forward.1} parent=1 // pred_fallthru
      _
    // Predicated region
    $region26: #{_forward.1} parent=1 // pred_check
      _
    $region27: #{_forward.1} parent=1 // pred_check_branch
      %819 = sbr.rel (0) target = $region29
    $region28: #{_forward.1} parent=1 // pred_region
      %820 = dma.done [#allocation4], 32
    $region29: #{_forward.1} parent=1 // pred_fallthru
      _
    // Predicated region
    $region30: #{_forward.1} parent=1 // pred_check
      _
    $region31: #{_forward.1} parent=1 // pred_check_branch
      %822 = sbr.rel (0) target = $region33
    $region32: #{_forward.1} parent=1 // pred_region
      %823 = dma.done [#allocation6], 32
    $region33: #{_forward.1} parent=1 // pred_fallthru
      _
    %824 = vsyncpa [#allocation4], 1
    %825 = vsyncpa [#allocation6], 1

</llo_original>
